<compile_context>
chip_gen: v7x
topology: tpu7x:2x2x1
jax: 0.10.0
libtpu: 0.0.40
codegen_flags: <defaults>
</compile_context>

<pallas_src>
import jax
import jax.numpy as jnp
from jax.experimental import pallas as pl
from jax.experimental.pallas import tpu as pltpu

EPS = 1e-6


def _sublayer_output_kernel(x_ref, w_ref, b_ref, o_ref):
    """Fused LayerNorm -> Linear (sublayer, gamma/beta pre-folded) -> residual.

    x_ref: (TM, D) f32  token tile
    w_ref: (D,  D) f32  folded weight  W' = diag(gamma) @ W
    b_ref: (1,  D) f32  folded bias    b' = beta @ W + b
    o_ref: (TM, D)      output tile
    """
    x = x_ref[...].astype(jnp.float32)
    d = x.shape[-1]

    # --- LayerNorm stats on the (idle) MXU instead of the 2-unit XLU ---------
    # Row sums computed as matmuls against a lane-dense all-ones panel; the
    # MXU is <5% utilised in this kernel so these passes are effectively free,
    # while the XLU cross-lane reduces they replace were the saturating slot
    # on v6e/v7x.
    ones_panel = jnp.ones((d, 128), dtype=jnp.float32)

    sum_x = jnp.dot(x, ones_panel, preferred_element_type=jnp.float32)[:, :1]
    mean = sum_x * (1.0 / d)
    diff = x - mean

    sum_sq = jnp.dot(diff * diff, ones_panel,
                     preferred_element_type=jnp.float32)[:, :1]
    # torch.std is UNBIASED (divide by N-1); eps is added to std (not var).
    std = jnp.sqrt(sum_sq * (1.0 / (d - 1)))
    inv = pl.reciprocal(std + EPS, approx=False)   # exact; EUP slot has slack
    normed = diff * inv                            # gamma/beta folded into W', b'

    # --- sublayer Linear on the MXU: f32 operands, f32 accumulation ----------
    y = jnp.dot(normed, w_ref[...], preferred_element_type=jnp.float32)
    y = y + b_ref[...]

    # --- dropout (eval mode => identity) + residual ---------------------------
    # TODO(synk): training-mode dropout (pltpu.prng_random_bits mask, 1/(1-p) scale) not emitted.
    o_ref[...] = (x + y).astype(o_ref.dtype)


def _round_up(n, m):
    return ((n + m - 1) // m) * m


def _choose_tiling(m):
    """Return (TM, M_padded).

    Prefer large tiles (amortize ~0.35 us/grid-step fixed cost).  If no large
    tile divides M, use a fixed TM and pad (bounded waste) instead of a single
    full-extent block that could blow past VMEM on v7x.
    """
    for cand in (4096, 2048, 1024, 512, 256, 128):
        if m % cand == 0:
            return cand, m
    tm = min(1024, _round_up(m, 8))      # multiple of 8 (sublane granularity)
    return tm, _round_up(m, tm)


def sublayer_output(x, gamma, beta, w, b):
    """x: (B, S, D) float32, gamma/beta/b: (D,), w: (D, D). Returns (B, S, D)."""
    B, S, D = x.shape
    assert D >= 2, "unbiased std needs at least 2 features"
    M = B * S
    x2 = x.reshape(M, D)

    # Fold LayerNorm affine into the Linear (one-time O(D^2) wrapper-side cost):
    #   (gamma * n + beta) @ W + b  ==  n @ (diag(gamma) @ W) + (beta @ W + b)
    w_f32 = w.astype(jnp.float32)
    w_folded = gamma.astype(jnp.float32)[:, None] * w_f32
    b_folded = (beta.astype(jnp.float32) @ w_f32 + b.astype(jnp.float32)).reshape(1, D)

    TM, M_pad = _choose_tiling(M)
    if M_pad != M:
        # Zero rows are safe: diff=0, std=0 -> inv=1/eps finite, normed=0.
        x2 = jnp.pad(x2, ((0, M_pad - M), (0, 0)))
    grid = (M_pad // TM,)

    cost = pl.CostEstimate(
        flops=2 * M_pad * D * D + 2 * (2 * M_pad * D * 128),   # main matmul + 2 stats matmuls
        transcendentals=2 * M_pad,                              # sqrt + reciprocal per row
        bytes_accessed=2 * M_pad * D * 4 + D * D * 4 + D * 4,   # x + out + W + bias (f32)
    )

    out = pl.pallas_call(
        _sublayer_output_kernel,
        out_shape=jax.ShapeDtypeStruct((M_pad, D), x.dtype),
        grid=grid,
        in_specs=[
            pl.BlockSpec((TM, D), lambda i: (i, 0)),   # x tile, double-buffered DMA
            # NOTE: for production D (>=2048) add pipeline_mode=pl.Buffered(1)
            # here so the VMEM-resident weight is single-buffered on v7x.
            pl.BlockSpec((D, D), lambda i: (0, 0)),    # folded weight, VMEM-resident
            pl.BlockSpec((1, D), lambda i: (0, 0)),    # folded bias,   VMEM-resident
        ],
        out_specs=pl.BlockSpec((TM, D), lambda i: (i, 0)),
        compiler_params=pltpu.CompilerParams(
            # On v7x, pltpu.CORE_PARALLEL would shard the token axis across the
            # 2 TensorCores; plain "parallel" kept here for portability.
            dimension_semantics=("parallel",),
            vmem_limit_bytes=32 * 1024 * 1024,
        ),
        cost_estimate=cost,
    )(x2, w_folded, b_folded)

    if M_pad != M:
        out = out[:M]
    return out.reshape(B, S, D)


def _reference(x, gamma, beta, w, b):
    """Pure-JAX f32 reference matching the PyTorch module (eval-mode dropout)."""
    d = x.shape[-1]
    mean = jnp.mean(x, axis=-1, keepdims=True)
    diff = x - mean
    std = jnp.sqrt(jnp.sum(diff * diff, axis=-1, keepdims=True) / (d - 1))
    normed = gamma * diff / (std + EPS) + beta
    y = jnp.einsum("bsd,de->bse", normed, w) + b
    return x + y


if __name__ == "__main__":
    key = jax.random.PRNGKey(0)
    B, S, D = 2, 8, 128  # size = D = 128 features (lane-dense LayerNorm axis)

    k_x, k_w, k_b = jax.random.split(key, 3)
    x = jax.random.normal(k_x, (B, S, D), dtype=jnp.float32)

    # LayerNorm parameters (module init: ones / zeros)
    gamma = jnp.ones((D,), dtype=jnp.float32)
    beta = jnp.zeros((D,), dtype=jnp.float32)

    # Deterministic sublayer = Linear(D, D)
    w = jax.random.normal(k_w, (D, D), dtype=jnp.float32) * 0.05
    b = jax.random.normal(k_b, (D,), dtype=jnp.float32) * 0.05

    out = sublayer_output(x, gamma, beta, w, b)
    out = jax.block_until_ready(out)

    ref = _reference(x, gamma, beta, w, b)
    assert out.shape == (B, S, D)
    # All kernel math is f32; tolerance covers the case where the MXU runs the
    # f32 matmuls at DEFAULT (bf16-pass) precision on some generations.  On
    # chips with full-precision f32 matmul the error is ~1e-5.
    assert jnp.allclose(out, ref, atol=2e-2, rtol=2e-2), "mismatch vs reference"

    print("KERNEL_OK")
</pallas_src>

<mosaic_0001>
module attributes {stable_mosaic.version = 11 : i64} {
  func.func @_sublayer_output_kernel(%arg0: i32, %arg1: memref<16x128xf32, #tpu.memory_space<vmem>>, %arg2: memref<128x128xf32, #tpu.memory_space<vmem>>, %arg3: memref<1x128xf32, #tpu.memory_space<vmem>>, %arg4: memref<16x128xf32, #tpu.memory_space<vmem>>) attributes {dimension_semantics = [#tpu.dimension_semantics<parallel>], iteration_bounds = array<i64: 1>, scalar_prefetch = 0 : i64, scratch_operands = 0 : i64, tpu.core_type = #tpu.core_type<tc>, window_params = [{transform_indices = @transform_0, window_bounds = array<i64: 16, 128>}, {pipeline_mode = #tpu.pipeline_mode<synchronous>, transform_indices = @transform_1, window_bounds = array<i64: 128, 128>}, {pipeline_mode = #tpu.pipeline_mode<synchronous>, transform_indices = @transform_2, window_bounds = array<i64: 1, 128>}, {transform_indices = @transform_3, window_bounds = array<i64: 16, 128>}]} {
    %c0 = arith.constant 0 : index
    %c0_0 = arith.constant 0 : index
    %0 = vector.load %arg1[%c0, %c0_0] : memref<16x128xf32, #tpu.memory_space<vmem>>, vector<16x128xf32>
    %cst = arith.constant 1.000000e+00 : f32
    %1 = vector.broadcast %cst : f32 to vector<128x128xf32>
    %cst_1 = arith.constant dense<0.000000e+00> : vector<16x128xf32>
    %2 = tpu.matmul %0, %1, %cst_1 {dimension_numbers = #tpu.dot_dimension_numbers<[1], [0], [0], [1], [0, 0, 1, 1], [], []>} : vector<16x128xf32>, vector<128x128xf32>, vector<16x128xf32> -> vector<16x128xf32>
    %3 = vector.extract_strided_slice %2 {offsets = [0, 0], sizes = [16, 1], strides = [1, 1]} : vector<16x128xf32> to vector<16x1xf32>
    %cst_2 = arith.constant 7.812500e-03 : f32
    %4 = vector.broadcast %cst_2 : f32 to vector<16x1xf32>
    %5 = arith.mulf %3, %4 : vector<16x1xf32>
    %6 = vector.broadcast %5 : vector<16x1xf32> to vector<16x128xf32>
    %7 = arith.subf %0, %6 : vector<16x128xf32>
    %8 = arith.mulf %7, %7 : vector<16x128xf32>
    %cst_3 = arith.constant dense<0.000000e+00> : vector<16x128xf32>
    %9 = tpu.matmul %8, %1, %cst_3 {dimension_numbers = #tpu.dot_dimension_numbers<[1], [0], [0], [1], [0, 0, 1, 1], [], []>} : vector<16x128xf32>, vector<128x128xf32>, vector<16x128xf32> -> vector<16x128xf32>
    %10 = vector.extract_strided_slice %9 {offsets = [0, 0], sizes = [16, 1], strides = [1, 1]} : vector<16x128xf32> to vector<16x1xf32>
    %cst_4 = arith.constant 0.00787401571 : f32
    %11 = vector.broadcast %cst_4 : f32 to vector<16x1xf32>
    %12 = arith.mulf %10, %11 : vector<16x1xf32>
    %13 = math.sqrt %12 : vector<16x1xf32>
    %cst_5 = arith.constant 9.99999997E-7 : f32
    %14 = vector.broadcast %cst_5 : f32 to vector<16x1xf32>
    %15 = arith.addf %13, %14 : vector<16x1xf32>
    %16 = tpu.reciprocal %15 : vector<16x1xf32> -> vector<16x1xf32>
    %17 = vector.broadcast %16 : vector<16x1xf32> to vector<16x128xf32>
    %18 = arith.mulf %7, %17 : vector<16x128xf32>
    %c0_6 = arith.constant 0 : index
    %c0_7 = arith.constant 0 : index
    %19 = vector.load %arg2[%c0_6, %c0_7] : memref<128x128xf32, #tpu.memory_space<vmem>>, vector<128x128xf32>
    %cst_8 = arith.constant dense<0.000000e+00> : vector<16x128xf32>
    %20 = tpu.matmul %18, %19, %cst_8 {dimension_numbers = #tpu.dot_dimension_numbers<[1], [0], [0], [1], [0, 0, 1, 1], [], []>} : vector<16x128xf32>, vector<128x128xf32>, vector<16x128xf32> -> vector<16x128xf32>
    %c0_9 = arith.constant 0 : index
    %c0_10 = arith.constant 0 : index
    %21 = vector.load %arg3[%c0_9, %c0_10] : memref<1x128xf32, #tpu.memory_space<vmem>>, vector<1x128xf32>
    %22 = vector.broadcast %21 : vector<1x128xf32> to vector<16x128xf32>
    %23 = arith.addf %20, %22 : vector<16x128xf32>
    %24 = arith.addf %0, %23 : vector<16x128xf32>
    %c0_11 = arith.constant 0 : index
    %c0_12 = arith.constant 0 : index
    %25 = vector.load %arg4[%c0_11, %c0_12] : memref<16x128xf32, #tpu.memory_space<vmem>>, vector<16x128xf32>
    tpu.vector_store %arg4[%c0_11, %c0_12], %24 {strides = array<i32>} : memref<16x128xf32, #tpu.memory_space<vmem>>, vector<16x128xf32>,
    return
  }
  func.func @transform_0(%arg0: i32) -> (i32, i32) {
    %c0_i32 = arith.constant 0 : i32
    %c0_i32_0 = arith.constant 0 : i32
    return %arg0, %c0_i32 : i32, i32
  }
  func.func @transform_1(%arg0: i32) -> (i32, i32) {
    %c0_i32 = arith.constant 0 : i32
    %c0_i32_0 = arith.constant 0 : i32
    %c0_i32_1 = arith.constant 0 : i32
    return %c0_i32, %c0_i32_0 : i32, i32
  }
  func.func @transform_2(%arg0: i32) -> (i32, i32) {
    %c0_i32 = arith.constant 0 : i32
    %c0_i32_0 = arith.constant 0 : i32
    %c0_i32_1 = arith.constant 0 : i32
    return %c0_i32, %c0_i32_0 : i32, i32
  }
  func.func @transform_3(%arg0: i32) -> (i32, i32) {
    %c0_i32 = arith.constant 0 : i32
    %c0_i32_0 = arith.constant 0 : i32
    return %arg0, %c0_i32 : i32, i32
  }
}

</mosaic_0001>

<llo_original>
// kernel: tpu_custom_call.1
$region0: #{tpu_custom_call.1}
  #allocation0 [shape = 'u32[]', space=smem, size = 0x4, offset = 0x4, fixed_abs, tag = 'smem constant byte address 0x4 - core index']
  #allocation1 [shape = 'u32[144,128]{1,0:T(1,128)}', space=vmem, size = 0x12000, scoped, tag = 'internal scratch']
  %s0 = inlined_call_operand.hbm [shape: f32[16,128], index: 0, kind: input, shape index: {}]
  %s1 = inlined_call_operand.hbm [shape: f32[128,128], index: 1, kind: input, shape index: {}]
  %s2 = inlined_call_operand.vmem [shape: f32[1,128], index: 2, kind: input, shape index: {}]
  %s3 = inlined_call_operand.hbm [shape: f32[16,128], index: 3, kind: output, shape index: {}]
  %s4 = sld [smem:[#allocation0]]
  $region30: #{tpu_custom_call.1} parent=0
    _
  %s6 = ssub.s32 1, %s4
  %s7 = scalar_select 0, %s6, %s4
  $region1: #{tpu_custom_call.1} parent=0
    #allocation2 [shape = 'u8[8192]{0}', space=vmem, size = 0x2000, scoped, tag = 'input window, operand 0, single buffered']
    #allocation3 [shape = 's32[1]{0}', space=sflag, size = 0x4, scoped, tag = 'scoped memory for tpu_custom_call.1']
    #allocation4 [shape = 's32[1]{0}', space=sflag, size = 0x4, scoped, tag = 'scoped memory for tpu_custom_call.1']
    #allocation5 [shape = 'u8[65536]{0}', space=vmem, size = 0x10000, scoped, tag = 'input window, operand 1, single buffered']
    #allocation6 [shape = 's32[1]{0}', space=sflag, size = 0x4, scoped, tag = 'scoped memory for tpu_custom_call.1']
    #allocation7 [shape = 'u8[8192]{0}', space=vmem, size = 0x2000, scoped, tag = 'output window, operand 0, single buffered']
    %8 = vsyncpa [#allocation3], 0
    %9 = vsyncpa [#allocation6], 0
    %10 = vsyncpa [#allocation4], 0
    // Predicated region
    $region2: #{tpu_custom_call.1} parent=1 // pred_check
      _
    $region3: #{tpu_custom_call.1} parent=1 // pred_check_branch
      %12 = sbr.rel (0) target = $region5
    $region4: #{tpu_custom_call.1} parent=1 // pred_region
      %s14 = ssub.s32 256, 256
      %15 = vsyncadd [#allocation3], %s14
      %s16 = sshll.u32 [#allocation2], 4
      %s17 = int_to_ptr.vmem [resolvable:$true] %s16
      %22 = dma.hbm_to_vmem [thread:$0]  %s0, 256, %s17, [#allocation3], 128, 128, 8
    $region5: #{tpu_custom_call.1} parent=1 // pred_fallthru
      _
    // Predicated region
    $region6: #{tpu_custom_call.1} parent=1 // pred_check
      _
    $region7: #{tpu_custom_call.1} parent=1 // pred_check_branch
      %24 = sbr.rel (0) target = $region9
    $region8: #{tpu_custom_call.1} parent=1 // pred_region
      %s26 = ssub.s32 2048, 2048
      %27 = vsyncadd [#allocation6], %s26
      %s28 = sshll.u32 [#allocation5], 4
      %s29 = int_to_ptr.vmem [resolvable:$true] %s28
      %34 = dma.hbm_to_vmem [thread:$0]  %s1, 2048, %s29, [#allocation6], 128, 128, 8
    $region9: #{tpu_custom_call.1} parent=1 // pred_fallthru
      _
    // Predicated region
    $region10: #{tpu_custom_call.1} parent=1 // pred_check
      _
    $region11: #{tpu_custom_call.1} parent=1 // pred_check_branch
      %36 = sbr.rel (0) target = $region13
    $region12: #{tpu_custom_call.1} parent=1 // pred_region
      _
    $region13: #{tpu_custom_call.1} parent=1 // pred_fallthru
      _
    // Predicated region
    $region14: #{tpu_custom_call.1} parent=1 // pred_check
      _
    $region15: #{tpu_custom_call.1} parent=1 // pred_check_branch
      %38 = sbr.rel (0) target = $region17
    $region16: #{tpu_custom_call.1} parent=1 // pred_region
      %39 = dma.done [#allocation3], 256
    $region17: #{tpu_custom_call.1} parent=1 // pred_fallthru
      _
    // Predicated region
    $region18: #{tpu_custom_call.1} parent=1 // pred_check
      _
    $region19: #{tpu_custom_call.1} parent=1 // pred_check_branch
      %41 = sbr.rel (0) target = $region21
    $region20: #{tpu_custom_call.1} parent=1 // pred_region
      %42 = dma.done [#allocation6], 2048
    $region21: #{tpu_custom_call.1} parent=1 // pred_fallthru
      _
    %v43 = vld [vmem:[#allocation2] sm:$0xff]
    %v44 = vld [vmem:[#allocation2 + $0x8] sm:$0xff]
    %45 = vmatprep.subr.mxu0 0.0
    %46 = vmatpush1.msra.mxu0 1.0
    %47 = vmatprep.subr.mxu0 0.0
    %48 = vmatpush1.msra.mxu0 1.0
    %49 = vmatprep.subr.mxu0 0.0
    %50 = vmatpush1.msra.mxu0 1.0
    %51 = vmatprep.subr.mxu0 0.0
    %52 = vmatpush1.msra.mxu0 1.0
    %53 = vmatprep.subr.mxu0 0.0
    %54 = vmatpush1.msra.mxu0 1.0
    %55 = vmatprep.subr.mxu0 0.0
    %56 = vmatpush1.msra.mxu0 1.0
    %57 = vmatprep.subr.mxu0 0.0
    %58 = vmatpush1.msra.mxu0 1.0
    %59 = vmatprep.subr.mxu0 0.0
    %60 = vmatpush1.msra.mxu0 1.0
    %61 = vmatprep.subr.mxu0 0.0
    %62 = vmatpush1.msra.mxu0 1.0
    %63 = vmatprep.subr.mxu0 0.0
    %64 = vmatpush1.msra.mxu0 1.0
    %65 = vmatprep.subr.mxu0 0.0
    %66 = vmatpush1.msra.mxu0 1.0
    %67 = vmatprep.subr.mxu0 0.0
    %68 = vmatpush1.msra.mxu0 1.0
    %69 = vmatprep.subr.mxu0 0.0
    %70 = vmatpush1.msra.mxu0 1.0
    %71 = vmatprep.subr.mxu0 0.0
    %72 = vmatpush1.msra.mxu0 1.0
    %73 = vmatprep.subr.mxu0 0.0
    %74 = vmatpush1.msra.mxu0 1.0
    %75 = vmatprep.subr.mxu0 0.0
    %76 = vmatpush1.msra.mxu0 1.0
    %77 = vmatprep.subr.mxu0 0.0
    %78 = vmatpush1.msra.mxu0 0.0
    %79 = vmatprep.subr.mxu0 0.0
    %80 = vmatpush1.msra.mxu0 0.0
    %81 = vmatprep.subr.mxu0 0.0
    %82 = vmatpush1.msra.mxu0 0.0
    %83 = vmatprep.subr.mxu0 0.0
    %84 = vmatpush1.msra.mxu0 0.0
    %85 = vmatprep.subr.mxu0 0.0
    %86 = vmatpush1.msra.mxu0 0.0
    %87 = vmatprep.subr.mxu0 0.0
    %88 = vmatpush1.msra.mxu0 0.0
    %89 = vmatprep.subr.mxu0 0.0
    %90 = vmatpush1.msra.mxu0 0.0
    %91 = vmatprep.subr.mxu0 0.0
    %92 = vmatpush1.msra.mxu0 0.0
    %93 = vmatprep.subr.mxu0 0.0
    %94 = vmatpush1.msra.mxu0 0.0
    %95 = vmatprep.subr.mxu0 0.0
    %96 = vmatpush1.msra.mxu0 0.0
    %97 = vmatprep.subr.mxu0 0.0
    %98 = vmatpush1.msra.mxu0 0.0
    %99 = vmatprep.subr.mxu0 0.0
    %100 = vmatpush1.msra.mxu0 0.0
    %101 = vmatprep.subr.mxu0 0.0
    %102 = vmatpush1.msra.mxu0 0.0
    %103 = vmatprep.subr.mxu0 0.0
    %104 = vmatpush1.msra.mxu0 0.0
    %105 = vmatprep.subr.mxu0 0.0
    %106 = vmatpush1.msra.mxu0 0.0
    %107 = vmatprep.subr.mxu0 0.0
    %108 = vmatpush1.msra.mxu0 0.0
    %109 = vmatprep.mubr.f32.mxu0 0.0
    %110 = vmatmul.mubr.f32.gmra.mrb[0].mxu0 %v43
    %v111 = vpop.f32.mrb[0].mxu0
    %v112 = vadd.f32 0.0, %v111
    %v113 = vpop.f32.mrb[0].mxu0
    %114 = vmatprep.mubr.f32.mxu0 0.0
    %115 = vmatmul.mubr.f32.gmra.mrb[0].mxu0 %v44
    %v116 = vpop.f32.mrb[0].mxu0
    %v117 = vadd.f32 0.0, %v116
    %v118 = vpop.f32.mrb[0].mxu0
    %119 = vdwg.mxu0
    %v120 = vmul.f32 %v112, 0.0078125
    %v121 = vmul.f32 %v117, 0.0078125
    %123 = vset.pattern.permute.xlu0 0
    %124 = vperm.xlu0 %123, %v120
    %v125 = vpop.permute.xlu0 %124
    %128 = vset.pattern.permute.xlu0 0
    %129 = vperm.xlu0 %128, %v121
    %v130 = vpop.permute.xlu0 %129
    %v132 = vsub.f32 %v43, %v125
    %v133 = vsub.f32 %v44, %v130
    %v134 = vmul.f32 %v132, %v132
    %v135 = vmul.f32 %v133, %v133
    %136 = vmatprep.subr.mxu0 0.0
    %137 = vmatpush1.msra.mxu0 1.0
    %138 = vmatprep.subr.mxu0 0.0
    %139 = vmatpush1.msra.mxu0 1.0
    %140 = vmatprep.subr.mxu0 0.0
    %141 = vmatpush1.msra.mxu0 1.0
    %142 = vmatprep.subr.mxu0 0.0
    %143 = vmatpush1.msra.mxu0 1.0
    %144 = vmatprep.subr.mxu0 0.0
    %145 = vmatpush1.msra.mxu0 1.0
    %146 = vmatprep.subr.mxu0 0.0
    %147 = vmatpush1.msra.mxu0 1.0
    %148 = vmatprep.subr.mxu0 0.0
    %149 = vmatpush1.msra.mxu0 1.0
    %150 = vmatprep.subr.mxu0 0.0
    %151 = vmatpush1.msra.mxu0 1.0
    %152 = vmatprep.subr.mxu0 0.0
    %153 = vmatpush1.msra.mxu0 1.0
    %154 = vmatprep.subr.mxu0 0.0
    %155 = vmatpush1.msra.mxu0 1.0
    %156 = vmatprep.subr.mxu0 0.0
    %157 = vmatpush1.msra.mxu0 1.0
    %158 = vmatprep.subr.mxu0 0.0
    %159 = vmatpush1.msra.mxu0 1.0
    %160 = vmatprep.subr.mxu0 0.0
    %161 = vmatpush1.msra.mxu0 1.0
    %162 = vmatprep.subr.mxu0 0.0
    %163 = vmatpush1.msra.mxu0 1.0
    %164 = vmatprep.subr.mxu0 0.0
    %165 = vmatpush1.msra.mxu0 1.0
    %166 = vmatprep.subr.mxu0 0.0
    %167 = vmatpush1.msra.mxu0 1.0
    %168 = vmatprep.subr.mxu0 0.0
    %169 = vmatpush1.msra.mxu0 0.0
    %170 = vmatprep.subr.mxu0 0.0
    %171 = vmatpush1.msra.mxu0 0.0
    %172 = vmatprep.subr.mxu0 0.0
    %173 = vmatpush1.msra.mxu0 0.0
    %174 = vmatprep.subr.mxu0 0.0
    %175 = vmatpush1.msra.mxu0 0.0
    %176 = vmatprep.subr.mxu0 0.0
    %177 = vmatpush1.msra.mxu0 0.0
    %178 = vmatprep.subr.mxu0 0.0
    %179 = vmatpush1.msra.mxu0 0.0
    %180 = vmatprep.subr.mxu0 0.0
    %181 = vmatpush1.msra.mxu0 0.0
    %182 = vmatprep.subr.mxu0 0.0
    %183 = vmatpush1.msra.mxu0 0.0
    %184 = vmatprep.subr.mxu0 0.0
    %185 = vmatpush1.msra.mxu0 0.0
    %186 = vmatprep.subr.mxu0 0.0
    %187 = vmatpush1.msra.mxu0 0.0
    %188 = vmatprep.subr.mxu0 0.0
    %189 = vmatpush1.msra.mxu0 0.0
    %190 = vmatprep.subr.mxu0 0.0
    %191 = vmatpush1.msra.mxu0 0.0
    %192 = vmatprep.subr.mxu0 0.0
    %193 = vmatpush1.msra.mxu0 0.0
    %194 = vmatprep.subr.mxu0 0.0
    %195 = vmatpush1.msra.mxu0 0.0
    %196 = vmatprep.subr.mxu0 0.0
    %197 = vmatpush1.msra.mxu0 0.0
    %198 = vmatprep.subr.mxu0 0.0
    %199 = vmatpush1.msra.mxu0 0.0
    %200 = vmatprep.mubr.f32.mxu0 0.0
    %201 = vmatmul.mubr.f32.gmra.mrb[0].mxu0 %v134
    %v202 = vpop.f32.mrb[0].mxu0
    %v203 = vadd.f32 0.0, %v202
    %v204 = vpop.f32.mrb[0].mxu0
    %205 = vmatprep.mubr.f32.mxu0 0.0
    %206 = vmatmul.mubr.f32.gmra.mrb[0].mxu0 %v135
    %v207 = vpop.f32.mrb[0].mxu0
    %v208 = vadd.f32 0.0, %v207
    %v209 = vpop.f32.mrb[0].mxu0
    %210 = vdwg.mxu0
    %v211 = vmul.f32 %v203, 0.007874016
    %v212 = vmul.f32 %v208, 0.007874016
    %v213 = vrsqrt.pop %v211
    %v214 = vmul.f32 %v211, %v213
    %vm215 = vcmp.eq.f32.partialorder %v211, inf
    %v216 = vsel %vm215, %v211, %v214
    %vm217 = vcmp.eq.f32.partialorder %v211, 0.0
    %v218 = vand.u32 %v211, 2147483648
    %v219 = vsel %vm217, %v218, %v216
    %v220 = vrsqrt.pop %v212
    %v221 = vmul.f32 %v212, %v220
    %vm222 = vcmp.eq.f32.partialorder %v212, inf
    %v223 = vsel %vm222, %v212, %v221
    %vm224 = vcmp.eq.f32.partialorder %v212, 0.0
    %v225 = vand.u32 %v212, 2147483648
    %v226 = vsel %vm224, %v225, %v223
    %v227 = vadd.f32 %v219, 1e-06
    %v228 = vadd.f32 %v226, 1e-06
    %v229 = vrcp.pop %v227
    %v230 = vrcp.pop %v228
    %232 = vset.pattern.permute.xlu0 0
    %233 = vperm.xlu0 %232, %v229
    %v234 = vpop.permute.xlu0 %233
    %237 = vset.pattern.permute.xlu0 0
    %238 = vperm.xlu0 %237, %v230
    %v239 = vpop.permute.xlu0 %238
    %v241 = vmul.f32 %v132, %v234
    %v242 = vmul.f32 %v133, %v239
    %v243 = vld [vmem:[#allocation5] sm:$0xff]
    %v244 = vld [vmem:[#allocation5 + $0x8] sm:$0xff]
    %v245 = vld [vmem:[#allocation5 + $0x10] sm:$0xff]
    %v246 = vld [vmem:[#allocation5 + $0x18] sm:$0xff]
    %v247 = vld [vmem:[#allocation5 + $0x20] sm:$0xff]
    %v248 = vld [vmem:[#allocation5 + $0x28] sm:$0xff]
    %v249 = vld [vmem:[#allocation5 + $0x30] sm:$0xff]
    %v250 = vld [vmem:[#allocation5 + $0x38] sm:$0xff]
    %v251 = vld [vmem:[#allocation5 + $0x40] sm:$0xff]
    %v252 = vld [vmem:[#allocation5 + $0x48] sm:$0xff]
    %v253 = vld [vmem:[#allocation5 + $0x50] sm:$0xff]
    %v254 = vld [vmem:[#allocation5 + $0x58] sm:$0xff]
    %v255 = vld [vmem:[#allocation5 + $0x60] sm:$0xff]
    %v256 = vld [vmem:[#allocation5 + $0x68] sm:$0xff]
    %v257 = vld [vmem:[#allocation5 + $0x70] sm:$0xff]
    %v258 = vld [vmem:[#allocation5 + $0x78] sm:$0xff]
    %v259 = vld [vmem:[%s2] sm:$0x1]
    %v261 = vlaneseq
    %v262 = vshrl.u32 %v261, 7
    %v263 = vsub.s32 0, %v262
    %v264 = vrot.slane %v259, %v263
    %266 = vmatprep.subr.mxu0 0.0
    %267 = vmatpush1.msra.mxu0 %v243
    %268 = vmatprep.subr.mxu0 0.0
    %269 = vmatpush1.msra.mxu0 %v244
    %270 = vmatprep.subr.mxu0 0.0
    %271 = vmatpush1.msra.mxu0 %v245
    %272 = vmatprep.subr.mxu0 0.0
    %273 = vmatpush1.msra.mxu0 %v246
    %274 = vmatprep.subr.mxu0 0.0
    %275 = vmatpush1.msra.mxu0 %v247
    %276 = vmatprep.subr.mxu0 0.0
    %277 = vmatpush1.msra.mxu0 %v248
    %278 = vmatprep.subr.mxu0 0.0
    %279 = vmatpush1.msra.mxu0 %v249
    %280 = vmatprep.subr.mxu0 0.0
    %281 = vmatpush1.msra.mxu0 %v250
    %282 = vmatprep.subr.mxu0 0.0
    %283 = vmatpush1.msra.mxu0 %v251
    %284 = vmatprep.subr.mxu0 0.0
    %285 = vmatpush1.msra.mxu0 %v252
    %286 = vmatprep.subr.mxu0 0.0
    %287 = vmatpush1.msra.mxu0 %v253
    %288 = vmatprep.subr.mxu0 0.0
    %289 = vmatpush1.msra.mxu0 %v254
    %290 = vmatprep.subr.mxu0 0.0
    %291 = vmatpush1.msra.mxu0 %v255
    %292 = vmatprep.subr.mxu0 0.0
    %293 = vmatpush1.msra.mxu0 %v256
    %294 = vmatprep.subr.mxu0 0.0
    %295 = vmatpush1.msra.mxu0 %v257
    %296 = vmatprep.subr.mxu0 0.0
    %297 = vmatpush1.msra.mxu0 %v258
    %298 = vmatprep.subr.mxu0 0.0
    %299 = vmatpush1.msra.mxu0 0.0
    %300 = vmatprep.subr.mxu0 0.0
    %301 = vmatpush1.msra.mxu0 0.0
    %302 = vmatprep.subr.mxu0 0.0
    %303 = vmatpush1.msra.mxu0 0.0
    %304 = vmatprep.subr.mxu0 0.0
    %305 = vmatpush1.msra.mxu0 0.0
    %306 = vmatprep.subr.mxu0 0.0
    %307 = vmatpush1.msra.mxu0 0.0
    %308 = vmatprep.subr.mxu0 0.0
    %309 = vmatpush1.msra.mxu0 0.0
    %310 = vmatprep.subr.mxu0 0.0
    %311 = vmatpush1.msra.mxu0 0.0
    %312 = vmatprep.subr.mxu0 0.0
    %313 = vmatpush1.msra.mxu0 0.0
    %314 = vmatprep.subr.mxu0 0.0
    %315 = vmatpush1.msra.mxu0 0.0
    %316 = vmatprep.subr.mxu0 0.0
    %317 = vmatpush1.msra.mxu0 0.0
    %318 = vmatprep.subr.mxu0 0.0
    %319 = vmatpush1.msra.mxu0 0.0
    %320 = vmatprep.subr.mxu0 0.0
    %321 = vmatpush1.msra.mxu0 0.0
    %322 = vmatprep.subr.mxu0 0.0
    %323 = vmatpush1.msra.mxu0 0.0
    %324 = vmatprep.subr.mxu0 0.0
    %325 = vmatpush1.msra.mxu0 0.0
    %326 = vmatprep.subr.mxu0 0.0
    %327 = vmatpush1.msra.mxu0 0.0
    %328 = vmatprep.subr.mxu0 0.0
    %329 = vmatpush1.msra.mxu0 0.0
    %330 = vmatprep.mubr.f32.mxu0 0.0
    %331 = vmatmul.mubr.f32.gmra.mrb[0].mxu0 %v241
    %v332 = vpop.f32.mrb[0].mxu0
    %v333 = vadd.f32 %v264, %v332
    %v334 = vpop.f32.mrb[0].mxu0
    %335 = vmatprep.mubr.f32.mxu0 0.0
    %336 = vmatmul.mubr.f32.gmra.mrb[0].mxu0 %v242
    %v337 = vpop.f32.mrb[0].mxu0
    %v338 = vadd.f32 %v264, %v337
    %v339 = vpop.f32.mrb[0].mxu0
    %340 = vdwg.mxu0
    %v341 = vadd.f32 %v43, %v333
    %v342 = vadd.f32 %v44, %v338
    %343 = vst [vmem:[#allocation7] sm:$0xff] %v341
    %344 = vst [vmem:[#allocation7 + $0x8] sm:$0xff] %v342
    // Predicated region
    $region22: #{tpu_custom_call.1} parent=1 // pred_check
      _
    $region23: #{tpu_custom_call.1} parent=1 // pred_check_branch
      %346 = sbr.rel (0) target = $region25
    $region24: #{tpu_custom_call.1} parent=1 // pred_region
      %s348 = ssub.s32 256, 256
      %349 = vsyncadd [#allocation4], %s348
      %s350 = sshll.u32 [#allocation7], 4
      %s351 = int_to_ptr.vmem [resolvable:$true] %s350
      %356 = dma.vmem_to_hbm [thread:$0]  %s351, 256, %s3, [#allocation4], 128, 128, 8
    $region25: #{tpu_custom_call.1} parent=1 // pred_fallthru
      _
    // Predicated region
    $region26: #{tpu_custom_call.1} parent=1 // pred_check
      _
    $region27: #{tpu_custom_call.1} parent=1 // pred_check_branch
      %358 = sbr.rel (0) target = $region29
    $region28: #{tpu_custom_call.1} parent=1 // pred_region
      %359 = dma.done [#allocation4], 256
    $region29: #{tpu_custom_call.1} parent=1 // pred_fallthru
      _
    %360 = vsyncpa [#allocation3], 1
    %361 = vsyncpa [#allocation6], 1
    %362 = vsyncpa [#allocation4], 1

</llo_original>
